<compile_context>
chip_gen: v5e
topology: v5e:2x2
jax: 0.10.0
libtpu: 0.0.40
codegen_flags: <defaults>
</compile_context>

<pallas_src>
import jax
import jax.numpy as jnp
from jax.experimental import pallas as pl
from jax.experimental.pallas import tpu as pltpu

F_IN = 325   # fc1 in_features (kept unpadded; compiler pads the K dim)
H1 = 256
H2 = 64


def valuefunc_kernel(x_ref, w1_ref, b1_ref, w2_ref, b2_ref, w3_ref, b3_ref,
                     out_ref):
    # In-kernel bf16 cast (no-op if the caller already supplies bf16 x).
    x = x_ref[...].astype(jnp.bfloat16)                       # (TB, 325)

    # fc1 + relu : single bf16 MXU pass, f32 accumulation.
    h1 = jnp.dot(x, w1_ref[...], preferred_element_type=jnp.float32)
    h1 = jnp.maximum(h1 + b1_ref[...], 0.0)                   # (TB, 256) f32
    h1 = h1.astype(jnp.bfloat16)

    # fc2 + relu
    h2 = jnp.dot(h1, w2_ref[...], preferred_element_type=jnp.float32)
    h2 = jnp.maximum(h2 + b2_ref[...], 0.0)                   # (TB, 64) f32

    # value head (64 -> 1): VPU multiply + XLU lane reduce, then EUP tanh.
    v = jnp.sum(h2 * w3_ref[...], axis=-1, keepdims=True) + b3_ref[...]
    out_ref[...] = jnp.tanh(v)                                # (TB, 1) f32


def _round_up(n, m):
    return (n + m - 1) // m * m


def _resident_spec(shape):
    """Constant-index block (weights/biases): DMA'd once, resident in VMEM
    across all grid steps.  Request single-buffering when the installed Pallas
    supports it (VMEM headroom on v7x's smaller per-TC VMEM); otherwise fall
    back to the default (double-buffered) spec."""
    index_map = lambda i: (0,) * len(shape)
    try:
        return pl.BlockSpec(shape, index_map, pipeline_mode=pl.Buffered(1))
    except (AttributeError, TypeError, ValueError):
        return pl.BlockSpec(shape, index_map)


def _choose_tb(B, block_b):
    """Batch tile: multiple of 16 (sublane/bf16 packing), capped at block_b,
    and split so nb >= 2 whenever B is non-trivial (enables DMA/compute
    pipelining and v7x megacore sharding of the batch axis)."""
    block_b = max(16, _round_up(block_b, 16))
    if B > block_b:
        return block_b
    if B > 512:
        return min(block_b, _round_up(pl.cdiv(B, 2), 16))   # -> nb == 2
    return B   # single step; block == full batch dim is always a legal shape


def value_func_forward(x, params, *, block_b=1024):
    """x: (B, 325) float32 or bfloat16 -> (B, 1) float32."""
    w1, b1, w2, b2, w3, b3 = params
    B, F = x.shape
    assert F == F_IN, f"expected {F_IN} input features, got {F}"

    TB = _choose_tb(B, block_b)
    nb = pl.cdiv(B, TB)

    grid_spec = pltpu.PrefetchScalarGridSpec(
        num_scalar_prefetch=0,
        grid=(nb,),
        in_specs=[
            pl.BlockSpec((TB, F_IN), lambda i: (i, 0)),   # x tile (raw dtype)
            _resident_spec((F_IN, H1)),                   # w1 (resident)
            _resident_spec((1, H1)),                      # b1
            _resident_spec((H1, H2)),                     # w2
            _resident_spec((1, H2)),                      # b2
            _resident_spec((1, H2)),                      # w3 row
            _resident_spec((1, 1)),                       # b3
        ],
        out_specs=pl.BlockSpec((TB, 1), lambda i: (i, 0)),
    )

    return pl.pallas_call(
        valuefunc_kernel,
        out_shape=jax.ShapeDtypeStruct((B, 1), jnp.float32),
        grid_spec=grid_spec,
        compiler_params=pltpu.CompilerParams(
            dimension_semantics=("parallel",)),
    )(x, w1, b1, w2, b2, w3, b3)


def init_params(key):
    """PyTorch nn.Linear-style init (uniform +-1/sqrt(fan_in)), stored in the
    kernel's deployment layout:
      w1: (325, 256) bf16   b1: (1, 256) f32
      w2: (256, 64)  bf16   b2: (1, 64)  f32
      w3: (1, 64)    f32    b3: (1, 1)   f32   (value-head row, VPU reduce)
    """
    def linear(k, fan_in, fan_out):
        kw, kb = jax.random.split(k)
        bound = 1.0 / jnp.sqrt(jnp.float32(fan_in))
        w = jax.random.uniform(kw, (fan_in, fan_out), jnp.float32, -bound, bound)
        b = jax.random.uniform(kb, (1, fan_out), jnp.float32, -bound, bound)
        return w, b

    k1, k2, k3 = jax.random.split(key, 3)
    w1, b1 = linear(k1, F_IN, H1)
    w2, b2 = linear(k2, H1, H2)
    w3, b3 = linear(k3, H2, 1)
    return (w1.astype(jnp.bfloat16), b1,
            w2.astype(jnp.bfloat16), b2,
            w3.reshape(1, H2), b3.reshape(1, 1))


def reference_forward(x, params):
    """Pure-JAX reference mirroring the kernel's bf16/f32 numerics."""
    w1, b1, w2, b2, w3, b3 = params
    xb = x.astype(jnp.bfloat16)
    h1 = jnp.maximum(
        jnp.dot(xb, w1, preferred_element_type=jnp.float32) + b1, 0.0)
    h1 = h1.astype(jnp.bfloat16)
    h2 = jnp.maximum(
        jnp.dot(h1, w2, preferred_element_type=jnp.float32) + b2, 0.0)
    v = jnp.sum(h2 * w3, axis=-1, keepdims=True) + b3
    return jnp.tanh(v)


if __name__ == "__main__":
    key = jax.random.PRNGKey(0)
    kx1, kx2, kx3, kp = jax.random.split(key, 4)
    params = init_params(kp)

    # 1) Small online-MCTS batch: single grid step, f32 input, fused in-kernel cast.
    B = 8
    x = jax.random.normal(kx1, (B, F_IN), dtype=jnp.float32)
    out = jax.block_until_ready(value_func_forward(x, params))
    ref = reference_forward(x, params)
    assert out.shape == (B, 1), out.shape
    assert jnp.allclose(out, ref, atol=2e-3, rtol=2e-3), "mismatch (B=8, f32)"

    # 2) Multi-step pipelined grid with NON-divisible batch (partial last block:
    #    Pallas drops the out-of-range output rows; valid rows are row-independent).
    B2 = 50
    x2 = jax.random.normal(kx2, (B2, F_IN), dtype=jnp.float32)
    out2 = jax.block_until_ready(value_func_forward(x2, params, block_b=16))
    ref2 = reference_forward(x2, params)
    assert out2.shape == (B2, 1), out2.shape
    assert bool(jnp.all(jnp.isfinite(out2))), "non-finite output (B=50)"
    assert jnp.allclose(out2, ref2, atol=2e-3, rtol=2e-3), "mismatch (B=50, nondivisible)"

    # 3) bf16 producer path: x already bf16 -> in-kernel cast is a no-op and
    #    the dominant x HBM stream halves.
    B3 = 16
    x3 = jax.random.normal(kx3, (B3, F_IN), dtype=jnp.float32).astype(jnp.bfloat16)
    out3 = jax.block_until_ready(value_func_forward(x3, params, block_b=16))
    ref3 = reference_forward(x3, params)
    assert out3.shape == (B3, 1), out3.shape
    assert jnp.allclose(out3, ref3, atol=2e-3, rtol=2e-3), "mismatch (B=16, bf16)"

    print("KERNEL_OK")
</pallas_src>

<mosaic_0001>
module attributes {stable_mosaic.version = 11 : i64} {
  func.func @valuefunc_kernel(%arg0: i32, %arg1: memref<8x325xf32, #tpu.memory_space<vmem>>, %arg2: memref<325x256xbf16, #tpu.memory_space<vmem>>, %arg3: memref<1x256xf32, #tpu.memory_space<vmem>>, %arg4: memref<256x64xbf16, #tpu.memory_space<vmem>>, %arg5: memref<1x64xf32, #tpu.memory_space<vmem>>, %arg6: memref<1x64xf32, #tpu.memory_space<vmem>>, %arg7: memref<1x1xf32, #tpu.memory_space<vmem>>, %arg8: memref<8x1xf32, #tpu.memory_space<vmem>>) attributes {dimension_semantics = [#tpu.dimension_semantics<parallel>], iteration_bounds = array<i64: 1>, scalar_prefetch = 0 : i64, scratch_operands = 0 : i64, tpu.core_type = #tpu.core_type<tc>, window_params = [{transform_indices = @transform_0, window_bounds = array<i64: 8, 325>}, {pipeline_mode = #tpu.pipeline_mode<synchronous>, transform_indices = @transform_1, window_bounds = array<i64: 325, 256>}, {pipeline_mode = #tpu.pipeline_mode<synchronous>, transform_indices = @transform_2, window_bounds = array<i64: 1, 256>}, {pipeline_mode = #tpu.pipeline_mode<synchronous>, transform_indices = @transform_3, window_bounds = array<i64: 256, 64>}, {pipeline_mode = #tpu.pipeline_mode<synchronous>, transform_indices = @transform_4, window_bounds = array<i64: 1, 64>}, {pipeline_mode = #tpu.pipeline_mode<synchronous>, transform_indices = @transform_5, window_bounds = array<i64: 1, 64>}, {pipeline_mode = #tpu.pipeline_mode<synchronous>, transform_indices = @transform_6, window_bounds = array<i64: 1, 1>}, {transform_indices = @transform_7, window_bounds = array<i64: 8, 1>}]} {
    %c0 = arith.constant 0 : index
    %c0_0 = arith.constant 0 : index
    %0 = vector.load %arg1[%c0, %c0_0] : memref<8x325xf32, #tpu.memory_space<vmem>>, vector<8x325xf32>
    %1 = arith.truncf %0 : vector<8x325xf32> to vector<8x325xbf16>
    %c0_1 = arith.constant 0 : index
    %c0_2 = arith.constant 0 : index
    %2 = vector.load %arg2[%c0_1, %c0_2] : memref<325x256xbf16, #tpu.memory_space<vmem>>, vector<325x256xbf16>
    %cst = arith.constant dense<0.000000e+00> : vector<8x256xf32>
    %3 = tpu.matmul %1, %2, %cst {dimension_numbers = #tpu.dot_dimension_numbers<[1], [0], [0], [1], [0, 0, 1, 1], [], []>} : vector<8x325xbf16>, vector<325x256xbf16>, vector<8x256xf32> -> vector<8x256xf32>
    %c0_3 = arith.constant 0 : index
    %c0_4 = arith.constant 0 : index
    %4 = vector.load %arg3[%c0_3, %c0_4] : memref<1x256xf32, #tpu.memory_space<vmem>>, vector<1x256xf32>
    %5 = vector.broadcast %4 : vector<1x256xf32> to vector<8x256xf32>
    %6 = arith.addf %3, %5 : vector<8x256xf32>
    %cst_5 = arith.constant 0.000000e+00 : f32
    %7 = vector.broadcast %cst_5 : f32 to vector<8x256xf32>
    %8 = arith.maximumf %6, %7 : vector<8x256xf32>
    %9 = arith.truncf %8 : vector<8x256xf32> to vector<8x256xbf16>
    %c0_6 = arith.constant 0 : index
    %c0_7 = arith.constant 0 : index
    %10 = vector.load %arg4[%c0_6, %c0_7] : memref<256x64xbf16, #tpu.memory_space<vmem>>, vector<256x64xbf16>
    %cst_8 = arith.constant dense<0.000000e+00> : vector<8x64xf32>
    %11 = tpu.matmul %9, %10, %cst_8 {dimension_numbers = #tpu.dot_dimension_numbers<[1], [0], [0], [1], [0, 0, 1, 1], [], []>} : vector<8x256xbf16>, vector<256x64xbf16>, vector<8x64xf32> -> vector<8x64xf32>
    %c0_9 = arith.constant 0 : index
    %c0_10 = arith.constant 0 : index
    %12 = vector.load %arg5[%c0_9, %c0_10] : memref<1x64xf32, #tpu.memory_space<vmem>>, vector<1x64xf32>
    %13 = vector.broadcast %12 : vector<1x64xf32> to vector<8x64xf32>
    %14 = arith.addf %11, %13 : vector<8x64xf32>
    %cst_11 = arith.constant 0.000000e+00 : f32
    %15 = vector.broadcast %cst_11 : f32 to vector<8x64xf32>
    %16 = arith.maximumf %14, %15 : vector<8x64xf32>
    %c0_12 = arith.constant 0 : index
    %c0_13 = arith.constant 0 : index
    %17 = vector.load %arg6[%c0_12, %c0_13] : memref<1x64xf32, #tpu.memory_space<vmem>>, vector<1x64xf32>
    %18 = vector.broadcast %17 : vector<1x64xf32> to vector<8x64xf32>
    %19 = arith.mulf %16, %18 : vector<8x64xf32>
    %cst_14 = arith.constant dense<0.000000e+00> : vector<8xf32>
    %20 = vector.multi_reduction <add>, %19, %cst_14 [1] : vector<8x64xf32> to vector<8xf32>
    %21 = vector.shape_cast %20 : vector<8xf32> to vector<8x1xf32>
    %c0_15 = arith.constant 0 : index
    %c0_16 = arith.constant 0 : index
    %22 = vector.load %arg7[%c0_15, %c0_16] : memref<1x1xf32, #tpu.memory_space<vmem>>, vector<1x1xf32>
    %23 = vector.broadcast %22 : vector<1x1xf32> to vector<8x1xf32>
    %24 = arith.addf %21, %23 : vector<8x1xf32>
    %25 = math.tanh %24 : vector<8x1xf32>
    %c0_17 = arith.constant 0 : index
    %c0_18 = arith.constant 0 : index
    %26 = vector.load %arg8[%c0_17, %c0_18] : memref<8x1xf32, #tpu.memory_space<vmem>>, vector<8x1xf32>
    tpu.vector_store %arg8[%c0_17, %c0_18], %25 {strides = array<i32>} : memref<8x1xf32, #tpu.memory_space<vmem>>, vector<8x1xf32>,
    return
  }
  func.func @transform_0(%arg0: i32) -> (i32, i32) {
    %c0_i32 = arith.constant 0 : i32
    %c0_i32_0 = arith.constant 0 : i32
    return %arg0, %c0_i32 : i32, i32
  }
  func.func @transform_1(%arg0: i32) -> (i32, i32) {
    %c0_i32 = arith.constant 0 : i32
    %c0_i32_0 = arith.constant 0 : i32
    %c0_i32_1 = arith.constant 0 : i32
    return %c0_i32, %c0_i32_0 : i32, i32
  }
  func.func @transform_2(%arg0: i32) -> (i32, i32) {
    %c0_i32 = arith.constant 0 : i32
    %c0_i32_0 = arith.constant 0 : i32
    %c0_i32_1 = arith.constant 0 : i32
    return %c0_i32, %c0_i32_0 : i32, i32
  }
  func.func @transform_3(%arg0: i32) -> (i32, i32) {
    %c0_i32 = arith.constant 0 : i32
    %c0_i32_0 = arith.constant 0 : i32
    %c0_i32_1 = arith.constant 0 : i32
    return %c0_i32, %c0_i32_0 : i32, i32
  }
  func.func @transform_4(%arg0: i32) -> (i32, i32) {
    %c0_i32 = arith.constant 0 : i32
    %c0_i32_0 = arith.constant 0 : i32
    %c0_i32_1 = arith.constant 0 : i32
    return %c0_i32, %c0_i32_0 : i32, i32
  }
  func.func @transform_5(%arg0: i32) -> (i32, i32) {
    %c0_i32 = arith.constant 0 : i32
    %c0_i32_0 = arith.constant 0 : i32
    %c0_i32_1 = arith.constant 0 : i32
    return %c0_i32, %c0_i32_0 : i32, i32
  }
  func.func @transform_6(%arg0: i32) -> (i32, i32) {
    %c0_i32 = arith.constant 0 : i32
    %c0_i32_0 = arith.constant 0 : i32
    %c0_i32_1 = arith.constant 0 : i32
    return %c0_i32, %c0_i32_0 : i32, i32
  }
  func.func @transform_7(%arg0: i32) -> (i32, i32) {
    %c0_i32 = arith.constant 0 : i32
    %c0_i32_0 = arith.constant 0 : i32
    return %arg0, %c0_i32 : i32, i32
  }
}

</mosaic_0001>

<llo_original>
// kernel: tpu_custom_call.1
$region0: #{tpu_custom_call.1}
  #allocation0 [shape = 'u32[]', space=smem, size = 0x4, offset = 0x4, fixed_abs, tag = 'smem constant byte address 0x4 - core index']
  #allocation1 [shape = 'u32[72,128]{1,0:T(1,128)}', space=vmem, size = 0x9000, scoped, tag = 'internal scratch']
  #allocation2 [shape = 'f32[1,1]{1,0:T(1,128)S(1)}', space=vmem, size = 0x200, scoped, tag = 'scoped memory for tpu_custom_call.1']
  %s0 = inlined_call_operand.vmem [shape: f32[8,325], index: 0, kind: input, shape index: {}]
  %s1 = inlined_call_operand.hbm [shape: bf16[325,256], index: 1, kind: input, shape index: {}]
  %s2 = inlined_call_operand.vmem [shape: f32[1,256], index: 2, kind: input, shape index: {}]
  %s3 = inlined_call_operand.vmem [shape: bf16[256,64], index: 3, kind: input, shape index: {}]
  %s4 = inlined_call_operand.vmem [shape: f32[1,64], index: 4, kind: input, shape index: {}]
  %s5 = inlined_call_operand.vmem [shape: f32[1,64], index: 5, kind: input, shape index: {}]
  %s6 = inlined_call_operand.<no memory space> [shape: f32[1,1], index: 6, kind: input, shape index: {}]
  %s7 = inlined_call_operand.vmem [shape: f32[8,1], index: 7, kind: output, shape index: {}]
  %s8 = sld [smem:[#allocation0]]
  $region42: #{tpu_custom_call.1} parent=0
    _
  %s10 = ssub.s32 1, %s8
  %s11 = scalar_select 0, %s10, %s8
  %v12 = vstv %s6
  %13 = vst [vmem:[#allocation2] sm:$0x1] %v12
  $region1: #{tpu_custom_call.1} parent=0
    #allocation3 [shape = 'u8[167936]{0}', space=vmem, size = 0x29000, scoped, tag = 'input window, operand 1, single buffered']
    #allocation4 [shape = 's32[1]{0}', space=sflag, size = 0x4, scoped, tag = 'scoped memory for tpu_custom_call.1']
    %14 = vsyncpa [#allocation4], 0
    // Predicated region
    $region2: #{tpu_custom_call.1} parent=1 // pred_check
      _
    $region3: #{tpu_custom_call.1} parent=1 // pred_check_branch
      %16 = sbr.rel (0) target = $region5
    $region4: #{tpu_custom_call.1} parent=1 // pred_region
      _
    $region5: #{tpu_custom_call.1} parent=1 // pred_fallthru
      _
    // Predicated region
    $region6: #{tpu_custom_call.1} parent=1 // pred_check
      _
    $region7: #{tpu_custom_call.1} parent=1 // pred_check_branch
      %18 = sbr.rel (0) target = $region9
    $region8: #{tpu_custom_call.1} parent=1 // pred_region
      %20 = vsyncadd [#allocation4], 0
      %s21 = sshll.u32 %s1, 4
      %s22 = int_to_ptr.hbm [resolvable:$true] %s21
      %s23 = sshll.u32 [#allocation3], 4
      %s24 = int_to_ptr.vmem [resolvable:$true] %s23
      %29 = dma.hbm_to_vmem [thread:$0]  %s22, 5248, %s24, [#allocation4], 128, 128, 8
    $region9: #{tpu_custom_call.1} parent=1 // pred_fallthru
      _
    // Predicated region
    $region10: #{tpu_custom_call.1} parent=1 // pred_check
      _
    $region11: #{tpu_custom_call.1} parent=1 // pred_check_branch
      %31 = sbr.rel (0) target = $region13
    $region12: #{tpu_custom_call.1} parent=1 // pred_region
      _
    $region13: #{tpu_custom_call.1} parent=1 // pred_fallthru
      _
    // Predicated region
    $region14: #{tpu_custom_call.1} parent=1 // pred_check
      _
    $region15: #{tpu_custom_call.1} parent=1 // pred_check_branch
      %33 = sbr.rel (0) target = $region17
    $region16: #{tpu_custom_call.1} parent=1 // pred_region
      _
    $region17: #{tpu_custom_call.1} parent=1 // pred_fallthru
      _
    // Predicated region
    $region18: #{tpu_custom_call.1} parent=1 // pred_check
      _
    $region19: #{tpu_custom_call.1} parent=1 // pred_check_branch
      %35 = sbr.rel (0) target = $region21
    $region20: #{tpu_custom_call.1} parent=1 // pred_region
      _
    $region21: #{tpu_custom_call.1} parent=1 // pred_fallthru
      _
    // Predicated region
    $region22: #{tpu_custom_call.1} parent=1 // pred_check
      _
    $region23: #{tpu_custom_call.1} parent=1 // pred_check_branch
      %37 = sbr.rel (0) target = $region25
    $region24: #{tpu_custom_call.1} parent=1 // pred_region
      _
    $region25: #{tpu_custom_call.1} parent=1 // pred_fallthru
      _
    // Predicated region
    $region26: #{tpu_custom_call.1} parent=1 // pred_check
      _
    $region27: #{tpu_custom_call.1} parent=1 // pred_check_branch
      %39 = sbr.rel (0) target = $region29
    $region28: #{tpu_custom_call.1} parent=1 // pred_region
      _
    $region29: #{tpu_custom_call.1} parent=1 // pred_fallthru
      _
    // Predicated region
    $region30: #{tpu_custom_call.1} parent=1 // pred_check
      _
    $region31: #{tpu_custom_call.1} parent=1 // pred_check_branch
      %41 = sbr.rel (0) target = $region33
    $region32: #{tpu_custom_call.1} parent=1 // pred_region
      %43 = dma.done [#allocation4], 5248
    $region33: #{tpu_custom_call.1} parent=1 // pred_fallthru
      _
    %v45 = vld [vmem:[%s0] sm:$0xff]
    %v46 = vld [vmem:[%s0 + $0x8] sm:$0xff]
    %v47 = vld [vmem:[%s0 + $0x10] sm:$0xff]
    %v48 = vpack.c.bf16 %v45, %v45
    %v49 = vpack.c.bf16 %v46, %v46
    %v50 = vpack.c.bf16 %v47, %v47
    %v51 = vld [vmem:[#allocation3] sm:$0xff]
    %v52 = vld [vmem:[#allocation3 + $0x8] sm:$0xff]
    %v53 = vld [vmem:[#allocation3 + $0x10] sm:$0xff]
    %v54 = vld [vmem:[#allocation3 + $0x18] sm:$0xff]
    %v55 = vld [vmem:[#allocation3 + $0x20] sm:$0xff]
    %v56 = vld [vmem:[#allocation3 + $0x28] sm:$0xff]
    %v57 = vld [vmem:[#allocation3 + $0x30] sm:$0xff]
    %v58 = vld [vmem:[#allocation3 + $0x38] sm:$0xff]
    %v59 = vld [vmem:[#allocation3 + $0x40] sm:$0xff]
    %v60 = vld [vmem:[#allocation3 + $0x48] sm:$0xff]
    %v61 = vld [vmem:[#allocation3 + $0x50] sm:$0xff]
    %v62 = vld [vmem:[#allocation3 + $0x58] sm:$0xff]
    %v63 = vld [vmem:[#allocation3 + $0x60] sm:$0xff]
    %v64 = vld [vmem:[#allocation3 + $0x68] sm:$0xff]
    %v65 = vld [vmem:[#allocation3 + $0x70] sm:$0xff]
    %v66 = vld [vmem:[#allocation3 + $0x78] sm:$0xff]
    %v67 = vld [vmem:[#allocation3 + $0x80] sm:$0xff]
    %v68 = vld [vmem:[#allocation3 + $0x88] sm:$0xff]
    %v69 = vld [vmem:[#allocation3 + $0x90] sm:$0xff]
    %v70 = vld [vmem:[#allocation3 + $0x98] sm:$0xff]
    %v71 = vld [vmem:[#allocation3 + $0xa0] sm:$0xff]
    %v72 = vld [vmem:[#allocation3 + $0xa8] sm:$0xff]
    %v73 = vld [vmem:[#allocation3 + $0xb0] sm:$0xff]
    %v74 = vld [vmem:[#allocation3 + $0xb8] sm:$0xff]
    %v75 = vld [vmem:[#allocation3 + $0xc0] sm:$0xff]
    %v76 = vld [vmem:[#allocation3 + $0xc8] sm:$0xff]
    %v77 = vld [vmem:[#allocation3 + $0xd0] sm:$0xff]
    %v78 = vld [vmem:[#allocation3 + $0xd8] sm:$0xff]
    %v79 = vld [vmem:[#allocation3 + $0xe0] sm:$0xff]
    %v80 = vld [vmem:[#allocation3 + $0xe8] sm:$0xff]
    %v81 = vld [vmem:[#allocation3 + $0xf0] sm:$0xff]
    %v82 = vld [vmem:[#allocation3 + $0xf8] sm:$0xff]
    %v83 = vld [vmem:[#allocation3 + $0x100] sm:$0xff]
    %v84 = vld [vmem:[#allocation3 + $0x108] sm:$0xff]
    %v85 = vld [vmem:[#allocation3 + $0x110] sm:$0xff]
    %v86 = vld [vmem:[#allocation3 + $0x118] sm:$0xff]
    %v87 = vld [vmem:[#allocation3 + $0x120] sm:$0xff]
    %v88 = vld [vmem:[#allocation3 + $0x128] sm:$0xff]
    %v89 = vld [vmem:[#allocation3 + $0x130] sm:$0xff]
    %v90 = vld [vmem:[#allocation3 + $0x138] sm:$0xff]
    %v91 = vld [vmem:[#allocation3 + $0x140] sm:$0x77]
    %v92 = vld [vmem:[%s2] sm:$0x3]
    %v94 = vperm.slane %v92, 0
    %v95 = vperm.slane %v92, 1
    %v139 = vunpack.c.l.b16 %v51
    %v140 = vunpack.c.h.b16 %v51
    %v141 = vunpack.c.l.b16 %v52
    %v142 = vunpack.c.h.b16 %v52
    %v143 = vunpack.c.l.b16 %v53
    %v144 = vunpack.c.h.b16 %v53
    %v145 = vunpack.c.l.b16 %v54
    %v146 = vunpack.c.h.b16 %v54
    %v147 = vunpack.c.l.b16 %v55
    %v148 = vunpack.c.h.b16 %v55
    %v149 = vunpack.c.l.b16 %v56
    %v150 = vunpack.c.h.b16 %v56
    %v151 = vunpack.c.l.b16 %v57
    %v152 = vunpack.c.h.b16 %v57
    %v153 = vunpack.c.l.b16 %v58
    %v154 = vunpack.c.h.b16 %v58
    %v155 = vunpack.c.l.b16 %v59
    %v156 = vunpack.c.h.b16 %v59
    %v157 = vunpack.c.l.b16 %v60
    %v158 = vunpack.c.h.b16 %v60
    %v159 = vunpack.c.l.b16 %v61
    %v160 = vunpack.c.h.b16 %v61
    %v161 = vunpack.c.l.b16 %v62
    %v162 = vunpack.c.h.b16 %v62
    %v163 = vunpack.c.l.b16 %v63
    %v164 = vunpack.c.h.b16 %v63
    %v165 = vunpack.c.l.b16 %v64
    %v166 = vunpack.c.h.b16 %v64
    %v167 = vunpack.c.l.b16 %v65
    %v168 = vunpack.c.h.b16 %v65
    %v169 = vunpack.c.l.b16 %v66
    %v170 = vunpack.c.h.b16 %v66
    %v171 = vunpack.c.l.b16 %v67
    %v172 = vunpack.c.h.b16 %v67
    %v173 = vunpack.c.l.b16 %v68
    %v174 = vunpack.c.h.b16 %v68
    %v175 = vunpack.c.l.b16 %v69
    %v176 = vunpack.c.h.b16 %v69
    %v177 = vunpack.c.l.b16 %v70
    %v178 = vunpack.c.h.b16 %v70
    %v179 = vunpack.c.l.b16 %v71
    %v180 = vunpack.c.h.b16 %v71
    %v181 = vunpack.c.l.b16 %v72
    %v182 = vunpack.c.h.b16 %v72
    %v183 = vunpack.c.l.b16 %v73
    %v184 = vunpack.c.h.b16 %v73
    %v185 = vunpack.c.l.b16 %v74
    %v186 = vunpack.c.h.b16 %v74
    %v187 = vunpack.c.l.b16 %v75
    %v188 = vunpack.c.h.b16 %v75
    %v189 = vunpack.c.l.b16 %v76
    %v190 = vunpack.c.h.b16 %v76
    %v191 = vunpack.c.l.b16 %v77
    %v192 = vunpack.c.h.b16 %v77
    %v193 = vunpack.c.l.b16 %v78
    %v194 = vunpack.c.h.b16 %v78
    %v195 = vunpack.c.l.b16 %v79
    %v196 = vunpack.c.h.b16 %v79
    %v197 = vunpack.c.l.b16 %v80
    %v198 = vunpack.c.h.b16 %v80
    %v199 = vunpack.c.l.b16 %v81
    %v200 = vunpack.c.h.b16 %v81
    %v201 = vunpack.c.l.b16 %v82
    %v202 = vunpack.c.h.b16 %v82
    %v203 = vunpack.c.l.b16 %v83
    %v204 = vunpack.c.h.b16 %v83
    %v205 = vunpack.c.l.b16 %v84
    %v206 = vunpack.c.h.b16 %v84
    %v207 = vunpack.c.l.b16 %v85
    %v208 = vunpack.c.h.b16 %v85
    %v209 = vunpack.c.l.b16 %v86
    %v210 = vunpack.c.h.b16 %v86
    %v211 = vunpack.c.l.b16 %v87
    %v212 = vunpack.c.h.b16 %v87
    %v213 = vunpack.c.l.b16 %v88
    %v214 = vunpack.c.h.b16 %v88
    %v215 = vunpack.c.l.b16 %v89
    %v216 = vunpack.c.h.b16 %v89
    %v217 = vunpack.c.l.b16 %v90
    %v218 = vunpack.c.h.b16 %v90
    %v219 = vunpack.c.l.b16 %v91
    %v220 = vunpack.c.h.b16 %v91
    %v221 = vpack.c.b16 %v141, %v139
    %v222 = vpack.c.b16 %v142, %v140
    %v223 = vpack.c.b16 %v145, %v143
    %v224 = vpack.c.b16 %v146, %v144
    %v225 = vpack.c.b16 %v149, %v147
    %v226 = vpack.c.b16 %v150, %v148
    %v227 = vpack.c.b16 %v153, %v151
    %v228 = vpack.c.b16 %v154, %v152
    %v229 = vpack.c.b16 %v157, %v155
    %v230 = vpack.c.b16 %v158, %v156
    %v231 = vpack.c.b16 %v161, %v159
    %v232 = vpack.c.b16 %v162, %v160
    %v233 = vpack.c.b16 %v165, %v163
    %v234 = vpack.c.b16 %v166, %v164
    %v235 = vpack.c.b16 %v169, %v167
    %v236 = vpack.c.b16 %v170, %v168
    %v237 = vpack.c.b16 %v173, %v171
    %v238 = vpack.c.b16 %v174, %v172
    %v239 = vpack.c.b16 %v177, %v175
    %v240 = vpack.c.b16 %v178, %v176
    %v241 = vpack.c.b16 %v181, %v179
    %v242 = vpack.c.b16 %v182, %v180
    %v243 = vpack.c.b16 %v185, %v183
    %v244 = vpack.c.b16 %v186, %v184
    %v245 = vpack.c.b16 %v189, %v187
    %v246 = vpack.c.b16 %v190, %v188
    %v247 = vpack.c.b16 %v193, %v191
    %v248 = vpack.c.b16 %v194, %v192
    %v249 = vpack.c.b16 %v197, %v195
    %v250 = vpack.c.b16 %v198, %v196
    %v251 = vpack.c.b16 %v201, %v199
    %v252 = vpack.c.b16 %v202, %v200
    %v253 = vpack.c.b16 %v205, %v203
    %v254 = vpack.c.b16 %v206, %v204
    %v255 = vpack.c.b16 %v209, %v207
    %v256 = vpack.c.b16 %v210, %v208
    %v257 = vpack.c.b16 %v213, %v211
    %v258 = vpack.c.b16 %v214, %v212
    %v259 = vpack.c.b16 %v217, %v215
    %v260 = vpack.c.b16 %v218, %v216
    %v261 = vpack.c.b16 %v219, %v219
    %v262 = vpack.c.b16 %v220, %v220
    %vm303 = vcmask 564224
    %v305 = vsel %vm303, %v50, 0
    %vm307 = vcmask 1041408
    %vm308 = vcmask 1042432
    %v309 = vsel %vm307, 4294967295, 65535
    %v310 = vsel %vm308, %v309, 0
    %v312 = vand.u32 %v261, %v310
    %v315 = vand.u32 %v262, %v310
    %317 = vmatpush.bf16.msra.mxu0 %v235
    %318 = vmatpush.bf16.msra.mxu0 %v233
    %319 = vmatpush.bf16.msra.mxu0 %v231
    %320 = vmatpush.bf16.msra.mxu0 %v229
    %321 = vmatpush.bf16.msra.mxu0 %v227
    %322 = vmatpush.bf16.msra.mxu0 %v225
    %323 = vmatpush.bf16.msra.mxu0 %v223
    %324 = vmatpush.bf16.msra.mxu0 %v221
    %325 = vmatmul.bf16.gmra.mxu0 %v48
    %v326 = vpop.f32.mrf.mxu0
    %v327 = vadd.f32 %v94, %v326
    %v328 = vpop.f32.mrf.mxu0
    %329 = vdwg.mxu0
    %330 = vmatpush.bf16.msra.mxu0 %v251
    %331 = vmatpush.bf16.msra.mxu0 %v249
    %332 = vmatpush.bf16.msra.mxu0 %v247
    %333 = vmatpush.bf16.msra.mxu0 %v245
    %334 = vmatpush.bf16.msra.mxu0 %v243
    %335 = vmatpush.bf16.msra.mxu0 %v241
    %336 = vmatpush.bf16.msra.mxu0 %v239
    %337 = vmatpush.bf16.msra.mxu0 %v237
    %338 = vmatmul.bf16.gmra.mxu0 %v49
    %v339 = vpop.f32.mrf.mxu0
    %v340 = vadd.f32 %v327, %v339
    %v341 = vpop.f32.mrf.mxu0
    %342 = vdwg.mxu0
    %343 = vmatpush.bf16.msra.mxu0 0
    %344 = vmatpush.bf16.msra.mxu0 0
    %345 = vmatpush.bf16.msra.mxu0 0
    %346 = vmatpush.bf16.msra.mxu0 %v312
    %347 = vmatpush.bf16.msra.mxu0 %v259
    %348 = vmatpush.bf16.msra.mxu0 %v257
    %349 = vmatpush.bf16.msra.mxu0 %v255
    %350 = vmatpush.bf16.msra.mxu0 %v253
    %351 = vmatmul.bf16.gmra.mxu0 %v305
    %v352 = vpop.f32.mrf.mxu0
    %v353 = vadd.f32 %v340, %v352
    %v354 = vpop.f32.mrf.mxu0
    %355 = vdwg.mxu0
    %356 = vmatpush.bf16.msra.mxu0 %v236
    %357 = vmatpush.bf16.msra.mxu0 %v234
    %358 = vmatpush.bf16.msra.mxu0 %v232
    %359 = vmatpush.bf16.msra.mxu0 %v230
    %360 = vmatpush.bf16.msra.mxu0 %v228
    %361 = vmatpush.bf16.msra.mxu0 %v226
    %362 = vmatpush.bf16.msra.mxu0 %v224
    %363 = vmatpush.bf16.msra.mxu0 %v222
    %364 = vmatmul.bf16.gmra.mxu0 %v48
    %v365 = vpop.f32.mrf.mxu0
    %v366 = vadd.f32 %v95, %v365
    %v367 = vpop.f32.mrf.mxu0
    %368 = vdwg.mxu0
    %369 = vmatpush.bf16.msra.mxu0 %v252
    %370 = vmatpush.bf16.msra.mxu0 %v250
    %371 = vmatpush.bf16.msra.mxu0 %v248
    %372 = vmatpush.bf16.msra.mxu0 %v246
    %373 = vmatpush.bf16.msra.mxu0 %v244
    %374 = vmatpush.bf16.msra.mxu0 %v242
    %375 = vmatpush.bf16.msra.mxu0 %v240
    %376 = vmatpush.bf16.msra.mxu0 %v238
    %377 = vmatmul.bf16.gmra.mxu0 %v49
    %v378 = vpop.f32.mrf.mxu0
    %v379 = vadd.f32 %v366, %v378
    %v380 = vpop.f32.mrf.mxu0
    %381 = vdwg.mxu0
    %382 = vmatpush.bf16.msra.mxu0 0
    %383 = vmatpush.bf16.msra.mxu0 0
    %384 = vmatpush.bf16.msra.mxu0 0
    %385 = vmatpush.bf16.msra.mxu0 %v315
    %386 = vmatpush.bf16.msra.mxu0 %v260
    %387 = vmatpush.bf16.msra.mxu0 %v258
    %388 = vmatpush.bf16.msra.mxu0 %v256
    %389 = vmatpush.bf16.msra.mxu0 %v254
    %390 = vmatmul.bf16.gmra.mxu0 %v305
    %v391 = vpop.f32.mrf.mxu0
    %v392 = vadd.f32 %v379, %v391
    %v393 = vpop.f32.mrf.mxu0
    %394 = vdwg.mxu0
    %v395 = vmax.f32 %v353, 0.0
    %v396 = vmax.f32 %v392, 0.0
    %v397 = vpack.c.bf16 %v395, %v395
    %v398 = vpack.c.bf16 %v396, %v396
    %v399 = vld [vmem:[%s3] sm:$0xf]
    %v400 = vld [vmem:[%s3 + $0x4] sm:$0xf]
    %v401 = vld [vmem:[%s3 + $0x8] sm:$0xf]
    %v402 = vld [vmem:[%s3 + $0xc] sm:$0xf]
    %v403 = vld [vmem:[%s3 + $0x10] sm:$0xf]
    %v404 = vld [vmem:[%s3 + $0x14] sm:$0xf]
    %v405 = vld [vmem:[%s3 + $0x18] sm:$0xf]
    %v406 = vld [vmem:[%s3 + $0x1c] sm:$0xf]
    %v407 = vld [vmem:[%s3 + $0x20] sm:$0xf]
    %v408 = vld [vmem:[%s3 + $0x24] sm:$0xf]
    %v409 = vld [vmem:[%s3 + $0x28] sm:$0xf]
    %v410 = vld [vmem:[%s3 + $0x2c] sm:$0xf]
    %v411 = vld [vmem:[%s3 + $0x30] sm:$0xf]
    %v412 = vld [vmem:[%s3 + $0x34] sm:$0xf]
    %v413 = vld [vmem:[%s3 + $0x38] sm:$0xf]
    %v414 = vld [vmem:[%s3 + $0x3c] sm:$0xf]
    %v415 = vld [vmem:[%s3 + $0x40] sm:$0xf]
    %v416 = vld [vmem:[%s3 + $0x44] sm:$0xf]
    %v417 = vld [vmem:[%s3 + $0x48] sm:$0xf]
    %v418 = vld [vmem:[%s3 + $0x4c] sm:$0xf]
    %v419 = vld [vmem:[%s3 + $0x50] sm:$0xf]
    %v420 = vld [vmem:[%s3 + $0x54] sm:$0xf]
    %v421 = vld [vmem:[%s3 + $0x58] sm:$0xf]
    %v422 = vld [vmem:[%s3 + $0x5c] sm:$0xf]
    %v423 = vld [vmem:[%s3 + $0x60] sm:$0xf]
    %v424 = vld [vmem:[%s3 + $0x64] sm:$0xf]
    %v425 = vld [vmem:[%s3 + $0x68] sm:$0xf]
    %v426 = vld [vmem:[%s3 + $0x6c] sm:$0xf]
    %v427 = vld [vmem:[%s3 + $0x70] sm:$0xf]
    %v428 = vld [vmem:[%s3 + $0x74] sm:$0xf]
    %v429 = vld [vmem:[%s3 + $0x78] sm:$0xf]
    %v430 = vld [vmem:[%s3 + $0x7c] sm:$0xf]
    %v431 = vld [vmem:[%s4] sm:$0x1]
    %v433 = vperm.slane %v431, 0
    %v467 = vunpack.c.l.b16 %v399
    %v468 = vunpack.c.l.b16 %v400
    %v469 = vunpack.c.l.b16 %v401
    %v470 = vunpack.c.l.b16 %v402
    %v471 = vunpack.c.l.b16 %v403
    %v472 = vunpack.c.l.b16 %v404
    %v473 = vunpack.c.l.b16 %v405
    %v474 = vunpack.c.l.b16 %v406
    %v475 = vunpack.c.l.b16 %v407
    %v476 = vunpack.c.l.b16 %v408
    %v477 = vunpack.c.l.b16 %v409
    %v478 = vunpack.c.l.b16 %v410
    %v479 = vunpack.c.l.b16 %v411
    %v480 = vunpack.c.l.b16 %v412
    %v481 = vunpack.c.l.b16 %v413
    %v482 = vunpack.c.l.b16 %v414
    %v483 = vunpack.c.l.b16 %v415
    %v484 = vunpack.c.l.b16 %v416
    %v485 = vunpack.c.l.b16 %v417
    %v486 = vunpack.c.l.b16 %v418
    %v487 = vunpack.c.l.b16 %v419
    %v488 = vunpack.c.l.b16 %v420
    %v489 = vunpack.c.l.b16 %v421
    %v490 = vunpack.c.l.b16 %v422
    %v491 = vunpack.c.l.b16 %v423
    %v492 = vunpack.c.l.b16 %v424
    %v493 = vunpack.c.l.b16 %v425
    %v494 = vunpack.c.l.b16 %v426
    %v495 = vunpack.c.l.b16 %v427
    %v496 = vunpack.c.l.b16 %v428
    %v497 = vunpack.c.l.b16 %v429
    %v498 = vunpack.c.l.b16 %v430
    %v499 = vpack.c.b16 %v468, %v467
    %v500 = vpack.c.b16 %v470, %v469
    %v501 = vpack.c.b16 %v472, %v471
    %v502 = vpack.c.b16 %v474, %v473
    %v503 = vpack.c.b16 %v476, %v475
    %v504 = vpack.c.b16 %v478, %v477
    %v505 = vpack.c.b16 %v480, %v479
    %v506 = vpack.c.b16 %v482, %v481
    %v507 = vpack.c.b16 %v484, %v483
    %v508 = vpack.c.b16 %v486, %v485
    %v509 = vpack.c.b16 %v488, %v487
    %v510 = vpack.c.b16 %v490, %v489
    %v511 = vpack.c.b16 %v492, %v491
    %v512 = vpack.c.b16 %v494, %v493
    %v513 = vpack.c.b16 %v496, %v495
    %v514 = vpack.c.b16 %v498, %v497
    %531 = vmatpush.bf16.msra.mxu0 %v506
    %532 = vmatpush.bf16.msra.mxu0 %v505
    %533 = vmatpush.bf16.msra.mxu0 %v504
    %534 = vmatpush.bf16.msra.mxu0 %v503
    %535 = vmatpush.bf16.msra.mxu0 %v502
    %536 = vmatpush.bf16.msra.mxu0 %v501
    %537 = vmatpush.bf16.msra.mxu0 %v500
    %538 = vmatpush.bf16.msra.mxu0 %v499
    %539 = vmatmul.bf16.gmra.mxu0 %v397
    %v540 = vpop.f32.mrf.mxu0
    %v541 = vadd.f32 %v433, %v540
    %v542 = vpop.f32.mrf.mxu0
    %543 = vdwg.mxu0
    %544 = vmatpush.bf16.msra.mxu0 %v514
    %545 = vmatpush.bf16.msra.mxu0 %v513
    %546 = vmatpush.bf16.msra.mxu0 %v512
    %547 = vmatpush.bf16.msra.mxu0 %v511
    %548 = vmatpush.bf16.msra.mxu0 %v510
    %549 = vmatpush.bf16.msra.mxu0 %v509
    %550 = vmatpush.bf16.msra.mxu0 %v508
    %551 = vmatpush.bf16.msra.mxu0 %v507
    %552 = vmatmul.bf16.gmra.mxu0 %v398
    %v553 = vpop.f32.mrf.mxu0
    %v554 = vadd.f32 %v541, %v553
    %v555 = vpop.f32.mrf.mxu0
    %556 = vdwg.mxu0
    %v557 = vmax.f32 %v554, 0.0
    %v558 = vld [vmem:[%s5] sm:$0x1]
    %v560 = vperm.slane %v558, 0
    %v562 = vmul.f32 %v557, %v560
    %vm563 = vcmask 523264
    %v564 = vsel %vm563, %v562, 0.0
    %565 = vadd.xlane.f32.xlu0 %v564
    %v566 = vpop.xlane.xlu0 %565
    %v567 = vld [vmem:[#allocation2] sm:$0x1]
    %v569 = vperm.slane %v567, 0
    %v571 = vadd.f32 %v566, %v569
    %v572 = vtanh.pop %v571
    %vm573 = vcmask 7168
    %574 = vst.msk [vmem:[%s7] sm:$0xff] %vm573, %v572
    // Predicated region
    $region34: #{tpu_custom_call.1} parent=1 // pred_check
      _
    $region35: #{tpu_custom_call.1} parent=1 // pred_check_branch
      %576 = sbr.rel (0) target = $region37
    $region36: #{tpu_custom_call.1} parent=1 // pred_region
      _
    $region37: #{tpu_custom_call.1} parent=1 // pred_fallthru
      _
    // Predicated region
    $region38: #{tpu_custom_call.1} parent=1 // pred_check
      _
    $region39: #{tpu_custom_call.1} parent=1 // pred_check_branch
      %578 = sbr.rel (0) target = $region41
    $region40: #{tpu_custom_call.1} parent=1 // pred_region
      _
    $region41: #{tpu_custom_call.1} parent=1 // pred_fallthru
      _
    %579 = vsyncpa [#allocation4], 1

</llo_original>
